<compile_context>
chip_gen: v7x
topology: tpu7x:2x2x1
jax: 0.10.0
libtpu: 0.0.40
codegen_flags: <defaults>
</compile_context>

<pallas_src>
import jax
import jax.numpy as jnp
from jax.experimental import pallas as pl
from jax.experimental.pallas import tpu as pltpu


# ----------------------------- Pallas kernel -------------------------------

def network_kernel(len_ref, x_ref,
                   wqkv_ref, bqkv_ref, wo_ref, bo_ref,
                   ln1_g_ref, ln1_b_ref,
                   w1_ref, b1_ref, w2_ref, b2_ref,
                   ln2_g_ref, ln2_b_ref,
                   ws_ref, bs_ref,
                   out_ref):
    B, S, H = x_ref.shape
    Vp = out_ref.shape[2]

    x = x_ref[...]                                    # [B,S,H] f32 (combined embeddings)
    x2d = x.reshape(B * S, H)
    xb = x2d.astype(jnp.bfloat16)

    # --- fused QKV projection: one MXU pass (1/sqrt(H) folded into wq/bq)
    qkv = jnp.dot(xb, wqkv_ref[...], preferred_element_type=jnp.float32) + bqkv_ref[...]
    q = qkv[:, 0 * H:1 * H].reshape(B, S, H).astype(jnp.bfloat16)
    k = qkv[:, 1 * H:2 * H].reshape(B, S, H).astype(jnp.bfloat16)
    v = qkv[:, 2 * H:3 * H].reshape(B, S, H).astype(jnp.bfloat16)

    # --- batched self-attention with per-batch key-length masking
    s = jnp.einsum('bqd,bkd->bqk', q, k, preferred_element_type=jnp.float32)   # [B,S,S]
    key_ids = jax.lax.broadcasted_iota(jnp.int32, (B, S, S), 2)
    lens = len_ref[...].reshape(B, 1, 1)
    s = jnp.where(key_ids < lens, s, jnp.float32(-1e30))
    s = s - jnp.max(s, axis=-1, keepdims=True)
    p = jnp.exp(s)
    p = p * pl.reciprocal(jnp.sum(p, axis=-1, keepdims=True), approx=True)      # EUP divide

    attn = jnp.einsum('bqk,bkd->bqd', p.astype(jnp.bfloat16), v,
                      preferred_element_type=jnp.float32)                        # [B,S,H]
    attn = jnp.dot(attn.reshape(B * S, H).astype(jnp.bfloat16), wo_ref[...],
                   preferred_element_type=jnp.float32) + bo_ref[...]

    # --- residual + LayerNorm 1 (f32)
    h = x2d + attn
    mu = jnp.mean(h, axis=-1, keepdims=True)
    var = jnp.mean((h - mu) * (h - mu), axis=-1, keepdims=True)
    h = (h - mu) * jax.lax.rsqrt(var + 1e-5) * ln1_g_ref[...] + ln1_b_ref[...]

    # --- feed-forward (bf16 MXU, f32 accumulation)
    f = jnp.dot(h.astype(jnp.bfloat16), w1_ref[...],
                preferred_element_type=jnp.float32) + b1_ref[...]
    f = jnp.maximum(f, 0.0)
    f = jnp.dot(f.astype(jnp.bfloat16), w2_ref[...],
                preferred_element_type=jnp.float32) + b2_ref[...]

    # --- residual + LayerNorm 2 (f32)
    h2 = h + f
    mu2 = jnp.mean(h2, axis=-1, keepdims=True)
    var2 = jnp.mean((h2 - mu2) * (h2 - mu2), axis=-1, keepdims=True)
    h2 = (h2 - mu2) * jax.lax.rsqrt(var2 + 1e-5) * ln2_g_ref[...] + ln2_b_ref[...]

    # --- vocab scorer on a lane-dense (padded-to-128) output
    score = jnp.dot(h2.astype(jnp.bfloat16), ws_ref[...],
                    preferred_element_type=jnp.float32) + bs_ref[...]            # [B*S,Vp]
    out_ref[...] = score.reshape(B, S, Vp)


# ------------------------------ JAX wrapper --------------------------------

def _round_up(x, m):
    return (x + m - 1) // m * m


@jax.jit
def network_forward(params, token, class_tag, sect_tag, lengths):
    """token: [B,K,S] int32; class_tag/sect_tag: [B,S] int32; lengths: [B] int32."""
    B, K, S = token.shape
    H = params["wq"].shape[0]
    V = params["w_score"].shape[1]
    Vp = _round_up(V, 128)

    # Glue: embedding gathers + combine (padding_idx=0 honored: row 0 is zero).
    # token_emb.sum(dim=1) + sect_tag_emb + class_tag_emb
    x = (params["emb_token"][token].sum(axis=1)
         + params["emb_class"][class_tag]
         + params["emb_sect"][sect_tag]).astype(jnp.float32)          # [B,S,E]

    # Param prep: fuse QKV (fold 1/sqrt(H) into the Q slice), cast MXU weights
    # to bf16, pad the scorer to a lane-dense width.
    scale = 1.0 / jnp.sqrt(jnp.float32(H))
    wqkv = jnp.concatenate([params["wq"] * scale, params["wk"], params["wv"]],
                           axis=1).astype(jnp.bfloat16)               # [H,3H]
    bqkv = jnp.concatenate([params["bq"] * scale, params["bk"], params["bv"]],
                           axis=1).astype(jnp.float32)                # [1,3H]
    ws = jnp.zeros((H, Vp), jnp.bfloat16).at[:, :V].set(
        params["w_score"].astype(jnp.bfloat16))
    bs = jnp.zeros((1, Vp), jnp.float32).at[:, :V].set(params["b_score"])

    lens2d = lengths.reshape(B, 1).astype(jnp.int32)

    args = (lens2d, x,
            wqkv, bqkv,
            params["wo"].astype(jnp.bfloat16), params["bo"],
            params["ln1_g"], params["ln1_b"],
            params["w1"].astype(jnp.bfloat16), params["b1"],
            params["w2"].astype(jnp.bfloat16), params["b2"],
            params["ln2_g"], params["ln2_b"],
            ws, bs)

    vmem = pl.BlockSpec(memory_space=pltpu.MemorySpace.VMEM)
    out = pl.pallas_call(
        network_kernel,
        out_shape=jax.ShapeDtypeStruct((B, S, Vp), jnp.float32),
        in_specs=[vmem] * len(args),
        out_specs=vmem,
    )(*args)
    return out[:, :, :V]


# ------------------------- deterministic parameters ------------------------

def init_params(key, *, vocab, n_class, n_sect, E, H, F):
    assert E == H, "encoder_embedding_size == encoder_hidden_size in this config"
    ks = jax.random.split(key, 12)
    n = lambda k, shape, s=0.02: (s * jax.random.normal(k, shape)).astype(jnp.float32)

    def emb(k, rows, dim):
        w = n(k, (rows, dim), 0.1)
        return w.at[0].set(0.0)                   # padding_idx=0

    params = {
        "emb_token": emb(ks[0], vocab, E),
        "emb_class": emb(ks[1], n_class, E),
        "emb_sect":  emb(ks[2], n_sect, E),
        # attention (stored as [in, out] for direct x @ W use in-kernel)
        "wq": n(ks[3], (H, H)), "bq": jnp.zeros((1, H), jnp.float32),
        "wk": n(ks[4], (H, H)), "bk": jnp.zeros((1, H), jnp.float32),
        "wv": n(ks[5], (H, H)), "bv": jnp.zeros((1, H), jnp.float32),
        "wo": n(ks[6], (H, H)), "bo": jnp.zeros((1, H), jnp.float32),
        "ln1_g": jnp.ones((1, H), jnp.float32), "ln1_b": jnp.zeros((1, H), jnp.float32),
        # FFN
        "w1": n(ks[7], (H, F)), "b1": jnp.zeros((1, F), jnp.float32),
        "w2": n(ks[8], (F, H)), "b2": jnp.zeros((1, H), jnp.float32),
        # score = nn.Linear(H, vocab)   (PyTorch weight is [vocab, H]; we store W^T)
        "ln2_g": jnp.ones((1, H), jnp.float32), "ln2_b": jnp.zeros((1, H), jnp.float32),
        "w_score": n(ks[9], (H, vocab)), "b_score": jnp.zeros((1, vocab), jnp.float32),
    }
    return params


# ----------------------------------- main -----------------------------------

if __name__ == "__main__":
    B, K, S = 2, 3, 8          # batch, sub-tokens per position (summed over dim=1), seq len
    E = H = 32                 # encoder_embedding_size == encoder_hidden_size
    F = 64                     # FFN inner dim
    VOCAB = 96                 # src_lang.n_words
    N_CLASS, N_SECT = 6, 5     # len(src_lang.class_tag), len(src_lang.sect_tag)

    root = jax.random.PRNGKey(0)
    kp, kt, kc, ks_ = jax.random.split(root, 4)
    params = init_params(kp, vocab=VOCAB, n_class=N_CLASS, n_sect=N_SECT, E=E, H=H, F=F)

    token = jax.random.randint(kt, (B, K, S), 0, VOCAB, dtype=jnp.int32)
    class_tag = jax.random.randint(kc, (B, S), 0, N_CLASS, dtype=jnp.int32)
    sect_tag = jax.random.randint(ks_, (B, S), 0, N_SECT, dtype=jnp.int32)
    lengths = jnp.array([5, 8], dtype=jnp.int32)

    logits = network_forward(params, token, class_tag, sect_tag, lengths)
    jax.block_until_ready(logits)
    assert logits.shape == (B, S, VOCAB) and logits.dtype == jnp.float32
    print("KERNEL_OK")
</pallas_src>

<mosaic_0001>
module attributes {stable_mosaic.version = 11 : i64} {
  func.func @network_kernel(%arg0: memref<2x1xi32, #tpu.memory_space<vmem>>, %arg1: memref<2x8x32xf32, #tpu.memory_space<vmem>>, %arg2: memref<32x96xbf16, #tpu.memory_space<vmem>>, %arg3: memref<1x96xf32, #tpu.memory_space<vmem>>, %arg4: memref<32x32xbf16, #tpu.memory_space<vmem>>, %arg5: memref<1x32xf32, #tpu.memory_space<vmem>>, %arg6: memref<1x32xf32, #tpu.memory_space<vmem>>, %arg7: memref<1x32xf32, #tpu.memory_space<vmem>>, %arg8: memref<32x64xbf16, #tpu.memory_space<vmem>>, %arg9: memref<1x64xf32, #tpu.memory_space<vmem>>, %arg10: memref<64x32xbf16, #tpu.memory_space<vmem>>, %arg11: memref<1x32xf32, #tpu.memory_space<vmem>>, %arg12: memref<1x32xf32, #tpu.memory_space<vmem>>, %arg13: memref<1x32xf32, #tpu.memory_space<vmem>>, %arg14: memref<32x128xbf16, #tpu.memory_space<vmem>>, %arg15: memref<1x128xf32, #tpu.memory_space<vmem>>, %arg16: memref<2x8x128xf32, #tpu.memory_space<vmem>>) attributes {dimension_semantics = [], scalar_prefetch = 0 : i64, scratch_operands = 0 : i64, tpu.core_type = #tpu.core_type<tc>} {
    %c0 = arith.constant 0 : index
    %c0_0 = arith.constant 0 : index
    %c0_1 = arith.constant 0 : index
    %0 = vector.load %arg1[%c0, %c0_0, %c0_1] : memref<2x8x32xf32, #tpu.memory_space<vmem>>, vector<2x8x32xf32>
    %1 = vector.shape_cast %0 : vector<2x8x32xf32> to vector<16x32xf32>
    %2 = arith.truncf %1 : vector<16x32xf32> to vector<16x32xbf16>
    %c0_2 = arith.constant 0 : index
    %c0_3 = arith.constant 0 : index
    %3 = vector.load %arg2[%c0_2, %c0_3] : memref<32x96xbf16, #tpu.memory_space<vmem>>, vector<32x96xbf16>
    %cst = arith.constant dense<0.000000e+00> : vector<16x96xf32>
    %4 = tpu.matmul %2, %3, %cst {dimension_numbers = #tpu.dot_dimension_numbers<[1], [0], [0], [1], [0, 0, 1, 1], [], []>} : vector<16x32xbf16>, vector<32x96xbf16>, vector<16x96xf32> -> vector<16x96xf32>
    %c0_4 = arith.constant 0 : index
    %c0_5 = arith.constant 0 : index
    %5 = vector.load %arg3[%c0_4, %c0_5] : memref<1x96xf32, #tpu.memory_space<vmem>>, vector<1x96xf32>
    %6 = vector.broadcast %5 : vector<1x96xf32> to vector<16x96xf32>
    %7 = arith.addf %4, %6 : vector<16x96xf32>
    %8 = vector.extract_strided_slice %7 {offsets = [0, 0], sizes = [16, 32], strides = [1, 1]} : vector<16x96xf32> to vector<16x32xf32>
    %9 = vector.shape_cast %8 : vector<16x32xf32> to vector<2x8x32xf32>
    %10 = arith.truncf %9 : vector<2x8x32xf32> to vector<2x8x32xbf16>
    %11 = vector.extract_strided_slice %7 {offsets = [0, 32], sizes = [16, 32], strides = [1, 1]} : vector<16x96xf32> to vector<16x32xf32>
    %12 = vector.shape_cast %11 : vector<16x32xf32> to vector<2x8x32xf32>
    %13 = arith.truncf %12 : vector<2x8x32xf32> to vector<2x8x32xbf16>
    %14 = vector.extract_strided_slice %7 {offsets = [0, 64], sizes = [16, 32], strides = [1, 1]} : vector<16x96xf32> to vector<16x32xf32>
    %15 = vector.shape_cast %14 : vector<16x32xf32> to vector<2x8x32xf32>
    %16 = arith.truncf %15 : vector<2x8x32xf32> to vector<2x8x32xbf16>
    "tpu.trace_start"() <{level = 10 : i32, message = "bqd,bkd->bqk"}> : () -> ()
    %cst_6 = arith.constant dense<0.000000e+00> : vector<2x8x8xf32>
    %17 = tpu.matmul %10, %13, %cst_6 {dimension_numbers = #tpu.dot_dimension_numbers<[2], [2], [1], [1], [0, 0, 0, 1, 1, 1], [0], [0]>} : vector<2x8x32xbf16>, vector<2x8x32xbf16>, vector<2x8x8xf32> -> vector<2x8x8xf32>
    "tpu.trace_stop"() : () -> ()
    %18 = tpu.iota {dimensions = array<i32: 2>} : vector<2x8x8xi32>
    %c0_7 = arith.constant 0 : index
    %c0_8 = arith.constant 0 : index
    %19 = vector.load %arg0[%c0_7, %c0_8] : memref<2x1xi32, #tpu.memory_space<vmem>>, vector<2x1xi32>
    %20 = vector.shape_cast %19 : vector<2x1xi32> to vector<2x1x1xi32>
    %21 = vector.broadcast %20 : vector<2x1x1xi32> to vector<2x8x8xi32>
    %22 = arith.cmpi slt, %18, %21 : vector<2x8x8xi32>
    %cst_9 = arith.constant -1.000000e+30 : f32
    %23 = vector.broadcast %cst_9 : f32 to vector<2x8x8xf32>
    %24 = arith.select %22, %17, %23 : vector<2x8x8xi1>, vector<2x8x8xf32>
    %cst_10 = arith.constant dense<0xFF800000> : vector<2x8xf32>
    %25 = vector.multi_reduction <maximumf>, %24, %cst_10 [2] : vector<2x8x8xf32> to vector<2x8xf32>
    %26 = vector.shape_cast %25 : vector<2x8xf32> to vector<2x8x1xf32>
    %27 = vector.broadcast %26 : vector<2x8x1xf32> to vector<2x8x8xf32>
    %28 = arith.subf %24, %27 : vector<2x8x8xf32>
    %29 = math.exp %28 : vector<2x8x8xf32>
    %cst_11 = arith.constant dense<0.000000e+00> : vector<2x8xf32>
    %30 = vector.multi_reduction <add>, %29, %cst_11 [2] : vector<2x8x8xf32> to vector<2x8xf32>
    %31 = vector.shape_cast %30 : vector<2x8xf32> to vector<2x8x1xf32>
    %32 = tpu.reciprocal %31 {approx = true} : vector<2x8x1xf32> -> vector<2x8x1xf32>
    %33 = vector.broadcast %32 : vector<2x8x1xf32> to vector<2x8x8xf32>
    %34 = arith.mulf %29, %33 : vector<2x8x8xf32>
    %35 = arith.truncf %34 : vector<2x8x8xf32> to vector<2x8x8xbf16>
    "tpu.trace_start"() <{level = 10 : i32, message = "bqk,bkd->bqd"}> : () -> ()
    %cst_12 = arith.constant dense<0.000000e+00> : vector<2x8x32xf32>
    %36 = tpu.matmul %35, %16, %cst_12 {dimension_numbers = #tpu.dot_dimension_numbers<[2], [1], [1], [2], [0, 0, 0, 1, 1, 2], [0], [0]>} : vector<2x8x8xbf16>, vector<2x8x32xbf16>, vector<2x8x32xf32> -> vector<2x8x32xf32>
    "tpu.trace_stop"() : () -> ()
    %37 = vector.shape_cast %36 : vector<2x8x32xf32> to vector<16x32xf32>
    %38 = arith.truncf %37 : vector<16x32xf32> to vector<16x32xbf16>
    %c0_13 = arith.constant 0 : index
    %c0_14 = arith.constant 0 : index
    %39 = vector.load %arg4[%c0_13, %c0_14] : memref<32x32xbf16, #tpu.memory_space<vmem>>, vector<32x32xbf16>
    %cst_15 = arith.constant dense<0.000000e+00> : vector<16x32xf32>
    %40 = tpu.matmul %38, %39, %cst_15 {dimension_numbers = #tpu.dot_dimension_numbers<[1], [0], [0], [1], [0, 0, 1, 1], [], []>} : vector<16x32xbf16>, vector<32x32xbf16>, vector<16x32xf32> -> vector<16x32xf32>
    %c0_16 = arith.constant 0 : index
    %c0_17 = arith.constant 0 : index
    %41 = vector.load %arg5[%c0_16, %c0_17] : memref<1x32xf32, #tpu.memory_space<vmem>>, vector<1x32xf32>
    %42 = vector.broadcast %41 : vector<1x32xf32> to vector<16x32xf32>
    %43 = arith.addf %40, %42 : vector<16x32xf32>
    %44 = arith.addf %1, %43 : vector<16x32xf32>
    %cst_18 = arith.constant dense<0.000000e+00> : vector<16xf32>
    %45 = vector.multi_reduction <add>, %44, %cst_18 [1] : vector<16x32xf32> to vector<16xf32>
    %46 = vector.shape_cast %45 : vector<16xf32> to vector<16x1xf32>
    %cst_19 = arith.constant 3.200000e+01 : f32
    %47 = vector.broadcast %cst_19 : f32 to vector<16x1xf32>
    %48 = arith.divf %46, %47 : vector<16x1xf32>
    %49 = vector.broadcast %48 : vector<16x1xf32> to vector<16x32xf32>
    %50 = arith.subf %44, %49 : vector<16x32xf32>
    %51 = vector.broadcast %48 : vector<16x1xf32> to vector<16x32xf32>
    %52 = arith.subf %44, %51 : vector<16x32xf32>
    %53 = arith.mulf %50, %52 : vector<16x32xf32>
    %cst_20 = arith.constant dense<0.000000e+00> : vector<16xf32>
    %54 = vector.multi_reduction <add>, %53, %cst_20 [1] : vector<16x32xf32> to vector<16xf32>
    %55 = vector.shape_cast %54 : vector<16xf32> to vector<16x1xf32>
    %cst_21 = arith.constant 3.200000e+01 : f32
    %56 = vector.broadcast %cst_21 : f32 to vector<16x1xf32>
    %57 = arith.divf %55, %56 : vector<16x1xf32>
    %58 = vector.broadcast %48 : vector<16x1xf32> to vector<16x32xf32>
    %59 = arith.subf %44, %58 : vector<16x32xf32>
    %cst_22 = arith.constant 9.99999974E-6 : f32
    %60 = vector.broadcast %cst_22 : f32 to vector<16x1xf32>
    %61 = arith.addf %57, %60 : vector<16x1xf32>
    %62 = math.rsqrt %61 : vector<16x1xf32>
    %63 = vector.broadcast %62 : vector<16x1xf32> to vector<16x32xf32>
    %64 = arith.mulf %59, %63 : vector<16x32xf32>
    %c0_23 = arith.constant 0 : index
    %c0_24 = arith.constant 0 : index
    %65 = vector.load %arg6[%c0_23, %c0_24] : memref<1x32xf32, #tpu.memory_space<vmem>>, vector<1x32xf32>
    %66 = vector.broadcast %65 : vector<1x32xf32> to vector<16x32xf32>
    %67 = arith.mulf %64, %66 : vector<16x32xf32>
    %c0_25 = arith.constant 0 : index
    %c0_26 = arith.constant 0 : index
    %68 = vector.load %arg7[%c0_25, %c0_26] : memref<1x32xf32, #tpu.memory_space<vmem>>, vector<1x32xf32>
    %69 = vector.broadcast %68 : vector<1x32xf32> to vector<16x32xf32>
    %70 = arith.addf %67, %69 : vector<16x32xf32>
    %71 = arith.truncf %70 : vector<16x32xf32> to vector<16x32xbf16>
    %c0_27 = arith.constant 0 : index
    %c0_28 = arith.constant 0 : index
    %72 = vector.load %arg8[%c0_27, %c0_28] : memref<32x64xbf16, #tpu.memory_space<vmem>>, vector<32x64xbf16>
    %cst_29 = arith.constant dense<0.000000e+00> : vector<16x64xf32>
    %73 = tpu.matmul %71, %72, %cst_29 {dimension_numbers = #tpu.dot_dimension_numbers<[1], [0], [0], [1], [0, 0, 1, 1], [], []>} : vector<16x32xbf16>, vector<32x64xbf16>, vector<16x64xf32> -> vector<16x64xf32>
    %c0_30 = arith.constant 0 : index
    %c0_31 = arith.constant 0 : index
    %74 = vector.load %arg9[%c0_30, %c0_31] : memref<1x64xf32, #tpu.memory_space<vmem>>, vector<1x64xf32>
    %75 = vector.broadcast %74 : vector<1x64xf32> to vector<16x64xf32>
    %76 = arith.addf %73, %75 : vector<16x64xf32>
    %cst_32 = arith.constant 0.000000e+00 : f32
    %77 = vector.broadcast %cst_32 : f32 to vector<16x64xf32>
    %78 = arith.maximumf %76, %77 : vector<16x64xf32>
    %79 = arith.truncf %78 : vector<16x64xf32> to vector<16x64xbf16>
    %c0_33 = arith.constant 0 : index
    %c0_34 = arith.constant 0 : index
    %80 = vector.load %arg10[%c0_33, %c0_34] : memref<64x32xbf16, #tpu.memory_space<vmem>>, vector<64x32xbf16>
    %cst_35 = arith.constant dense<0.000000e+00> : vector<16x32xf32>
    %81 = tpu.matmul %79, %80, %cst_35 {dimension_numbers = #tpu.dot_dimension_numbers<[1], [0], [0], [1], [0, 0, 1, 1], [], []>} : vector<16x64xbf16>, vector<64x32xbf16>, vector<16x32xf32> -> vector<16x32xf32>
    %c0_36 = arith.constant 0 : index
    %c0_37 = arith.constant 0 : index
    %82 = vector.load %arg11[%c0_36, %c0_37] : memref<1x32xf32, #tpu.memory_space<vmem>>, vector<1x32xf32>
    %83 = vector.broadcast %82 : vector<1x32xf32> to vector<16x32xf32>
    %84 = arith.addf %81, %83 : vector<16x32xf32>
    %85 = arith.addf %70, %84 : vector<16x32xf32>
    %cst_38 = arith.constant dense<0.000000e+00> : vector<16xf32>
    %86 = vector.multi_reduction <add>, %85, %cst_38 [1] : vector<16x32xf32> to vector<16xf32>
    %87 = vector.shape_cast %86 : vector<16xf32> to vector<16x1xf32>
    %cst_39 = arith.constant 3.200000e+01 : f32
    %88 = vector.broadcast %cst_39 : f32 to vector<16x1xf32>
    %89 = arith.divf %87, %88 : vector<16x1xf32>
    %90 = vector.broadcast %89 : vector<16x1xf32> to vector<16x32xf32>
    %91 = arith.subf %85, %90 : vector<16x32xf32>
    %92 = vector.broadcast %89 : vector<16x1xf32> to vector<16x32xf32>
    %93 = arith.subf %85, %92 : vector<16x32xf32>
    %94 = arith.mulf %91, %93 : vector<16x32xf32>
    %cst_40 = arith.constant dense<0.000000e+00> : vector<16xf32>
    %95 = vector.multi_reduction <add>, %94, %cst_40 [1] : vector<16x32xf32> to vector<16xf32>
    %96 = vector.shape_cast %95 : vector<16xf32> to vector<16x1xf32>
    %cst_41 = arith.constant 3.200000e+01 : f32
    %97 = vector.broadcast %cst_41 : f32 to vector<16x1xf32>
    %98 = arith.divf %96, %97 : vector<16x1xf32>
    %99 = vector.broadcast %89 : vector<16x1xf32> to vector<16x32xf32>
    %100 = arith.subf %85, %99 : vector<16x32xf32>
    %cst_42 = arith.constant 9.99999974E-6 : f32
    %101 = vector.broadcast %cst_42 : f32 to vector<16x1xf32>
    %102 = arith.addf %98, %101 : vector<16x1xf32>
    %103 = math.rsqrt %102 : vector<16x1xf32>
    %104 = vector.broadcast %103 : vector<16x1xf32> to vector<16x32xf32>
    %105 = arith.mulf %100, %104 : vector<16x32xf32>
    %c0_43 = arith.constant 0 : index
    %c0_44 = arith.constant 0 : index
    %106 = vector.load %arg12[%c0_43, %c0_44] : memref<1x32xf32, #tpu.memory_space<vmem>>, vector<1x32xf32>
    %107 = vector.broadcast %106 : vector<1x32xf32> to vector<16x32xf32>
    %108 = arith.mulf %105, %107 : vector<16x32xf32>
    %c0_45 = arith.constant 0 : index
    %c0_46 = arith.constant 0 : index
    %109 = vector.load %arg13[%c0_45, %c0_46] : memref<1x32xf32, #tpu.memory_space<vmem>>, vector<1x32xf32>
    %110 = vector.broadcast %109 : vector<1x32xf32> to vector<16x32xf32>
    %111 = arith.addf %108, %110 : vector<16x32xf32>
    %112 = arith.truncf %111 : vector<16x32xf32> to vector<16x32xbf16>
    %c0_47 = arith.constant 0 : index
    %c0_48 = arith.constant 0 : index
    %113 = vector.load %arg14[%c0_47, %c0_48] : memref<32x128xbf16, #tpu.memory_space<vmem>>, vector<32x128xbf16>
    %cst_49 = arith.constant dense<0.000000e+00> : vector<16x128xf32>
    %114 = tpu.matmul %112, %113, %cst_49 {dimension_numbers = #tpu.dot_dimension_numbers<[1], [0], [0], [1], [0, 0, 1, 1], [], []>} : vector<16x32xbf16>, vector<32x128xbf16>, vector<16x128xf32> -> vector<16x128xf32>
    %c0_50 = arith.constant 0 : index
    %c0_51 = arith.constant 0 : index
    %115 = vector.load %arg15[%c0_50, %c0_51] : memref<1x128xf32, #tpu.memory_space<vmem>>, vector<1x128xf32>
    %116 = vector.broadcast %115 : vector<1x128xf32> to vector<16x128xf32>
    %117 = arith.addf %114, %116 : vector<16x128xf32>
    %118 = vector.shape_cast %117 : vector<16x128xf32> to vector<2x8x128xf32>
    %c0_52 = arith.constant 0 : index
    %c0_53 = arith.constant 0 : index
    %c0_54 = arith.constant 0 : index
    %119 = vector.load %arg16[%c0_52, %c0_53, %c0_54] : memref<2x8x128xf32, #tpu.memory_space<vmem>>, vector<2x8x128xf32>
    tpu.vector_store %arg16[%c0_52, %c0_53, %c0_54], %118 {strides = array<i32>} : memref<2x8x128xf32, #tpu.memory_space<vmem>>, vector<2x8x128xf32>,
    return
  }
}

</mosaic_0001>

<llo_original>
// kernel: network_forward.1
$region0: #{network_forward.1}
  #allocation0 [shape = 'u32[]', space=smem, size = 0x4, offset = 0x4, fixed_abs, tag = 'smem constant byte address 0x4 - core index']
  #allocation1 [shape = 'u32[144,128]{1,0:T(1,128)}', space=vmem, size = 0x12000, scoped, tag = 'internal scratch']
  %s0 = inlined_call_operand.vmem [shape: s32[2,1], index: 0, kind: input, shape index: {}]
  %s1 = inlined_call_operand.vmem [shape: f32[2,8,32], index: 1, kind: input, shape index: {}]
  %s2 = inlined_call_operand.vmem [shape: bf16[32,96], index: 2, kind: input, shape index: {}]
  %s3 = inlined_call_operand.vmem [shape: f32[1,96], index: 3, kind: input, shape index: {}]
  %s4 = inlined_call_operand.vmem [shape: bf16[32,32], index: 4, kind: input, shape index: {}]
  %s5 = inlined_call_operand.vmem [shape: f32[1,32], index: 5, kind: input, shape index: {}]
  %s6 = inlined_call_operand.vmem [shape: f32[1,32], index: 6, kind: input, shape index: {}]
  %s7 = inlined_call_operand.vmem [shape: f32[1,32], index: 7, kind: input, shape index: {}]
  %s8 = inlined_call_operand.vmem [shape: bf16[32,64], index: 8, kind: input, shape index: {}]
  %s9 = inlined_call_operand.vmem [shape: f32[1,64], index: 9, kind: input, shape index: {}]
  %s10 = inlined_call_operand.vmem [shape: bf16[64,32], index: 10, kind: input, shape index: {}]
  %s11 = inlined_call_operand.vmem [shape: f32[1,32], index: 11, kind: input, shape index: {}]
  %s12 = inlined_call_operand.vmem [shape: f32[1,32], index: 12, kind: input, shape index: {}]
  %s13 = inlined_call_operand.vmem [shape: f32[1,32], index: 13, kind: input, shape index: {}]
  %s14 = inlined_call_operand.vmem [shape: bf16[32,128], index: 14, kind: input, shape index: {}]
  %s15 = inlined_call_operand.vmem [shape: f32[1,128], index: 15, kind: input, shape index: {}]
  %s16 = inlined_call_operand.hbm [shape: f32[2,8,128], index: 16, kind: output, shape index: {}]
  %s17 = sld [smem:[#allocation0]]
  $region74: #{network_forward.1} parent=0
    _
  %s19 = ssub.s32 1, %s17
  %s20 = scalar_select 0, %s19, %s17
  $region1: #{network_forward.1} parent=0
    #allocation2 [shape = 'u8[8192]{0}', space=vmem, size = 0x2000, scoped, tag = 'output window, operand 0, single buffered']
    #allocation3 [shape = 's32[1]{0}', space=sflag, size = 0x4, scoped, tag = 'scoped memory for network_forward.1']
    %21 = vsyncpa [#allocation3], 0
    // Predicated region
    $region2: #{network_forward.1} parent=1 // pred_check
      _
    $region3: #{network_forward.1} parent=1 // pred_check_branch
      %23 = sbr.rel (0) target = $region5
    $region4: #{network_forward.1} parent=1 // pred_region
      _
    $region5: #{network_forward.1} parent=1 // pred_fallthru
      _
    // Predicated region
    $region6: #{network_forward.1} parent=1 // pred_check
      _
    $region7: #{network_forward.1} parent=1 // pred_check_branch
      %25 = sbr.rel (0) target = $region9
    $region8: #{network_forward.1} parent=1 // pred_region
      _
    $region9: #{network_forward.1} parent=1 // pred_fallthru
      _
    // Predicated region
    $region10: #{network_forward.1} parent=1 // pred_check
      _
    $region11: #{network_forward.1} parent=1 // pred_check_branch
      %27 = sbr.rel (0) target = $region13
    $region12: #{network_forward.1} parent=1 // pred_region
      _
    $region13: #{network_forward.1} parent=1 // pred_fallthru
      _
    // Predicated region
    $region14: #{network_forward.1} parent=1 // pred_check
      _
    $region15: #{network_forward.1} parent=1 // pred_check_branch
      %29 = sbr.rel (0) target = $region17
    $region16: #{network_forward.1} parent=1 // pred_region
      _
    $region17: #{network_forward.1} parent=1 // pred_fallthru
      _
    // Predicated region
    $region18: #{network_forward.1} parent=1 // pred_check
      _
    $region19: #{network_forward.1} parent=1 // pred_check_branch
      %31 = sbr.rel (0) target = $region21
    $region20: #{network_forward.1} parent=1 // pred_region
      _
    $region21: #{network_forward.1} parent=1 // pred_fallthru
      _
    // Predicated region
    $region22: #{network_forward.1} parent=1 // pred_check
      _
    $region23: #{network_forward.1} parent=1 // pred_check_branch
      %33 = sbr.rel (0) target = $region25
    $region24: #{network_forward.1} parent=1 // pred_region
      _
    $region25: #{network_forward.1} parent=1 // pred_fallthru
      _
    // Predicated region
    $region26: #{network_forward.1} parent=1 // pred_check
      _
    $region27: #{network_forward.1} parent=1 // pred_check_branch
      %35 = sbr.rel (0) target = $region29
    $region28: #{network_forward.1} parent=1 // pred_region
      _
    $region29: #{network_forward.1} parent=1 // pred_fallthru
      _
    // Predicated region
    $region30: #{network_forward.1} parent=1 // pred_check
      _
    $region31: #{network_forward.1} parent=1 // pred_check_branch
      %37 = sbr.rel (0) target = $region33
    $region32: #{network_forward.1} parent=1 // pred_region
      _
    $region33: #{network_forward.1} parent=1 // pred_fallthru
      _
    // Predicated region
    $region34: #{network_forward.1} parent=1 // pred_check
      _
    $region35: #{network_forward.1} parent=1 // pred_check_branch
      %39 = sbr.rel (0) target = $region37
    $region36: #{network_forward.1} parent=1 // pred_region
      _
    $region37: #{network_forward.1} parent=1 // pred_fallthru
      _
    // Predicated region
    $region38: #{network_forward.1} parent=1 // pred_check
      _
    $region39: #{network_forward.1} parent=1 // pred_check_branch
      %41 = sbr.rel (0) target = $region41
    $region40: #{network_forward.1} parent=1 // pred_region
      _
    $region41: #{network_forward.1} parent=1 // pred_fallthru
      _
    // Predicated region
    $region42: #{network_forward.1} parent=1 // pred_check
      _
    $region43: #{network_forward.1} parent=1 // pred_check_branch
      %43 = sbr.rel (0) target = $region45
    $region44: #{network_forward.1} parent=1 // pred_region
      _
    $region45: #{network_forward.1} parent=1 // pred_fallthru
      _
    // Predicated region
    $region46: #{network_forward.1} parent=1 // pred_check
      _
    $region47: #{network_forward.1} parent=1 // pred_check_branch
      %45 = sbr.rel (0) target = $region49
    $region48: #{network_forward.1} parent=1 // pred_region
      _
    $region49: #{network_forward.1} parent=1 // pred_fallthru
      _
    // Predicated region
    $region50: #{network_forward.1} parent=1 // pred_check
      _
    $region51: #{network_forward.1} parent=1 // pred_check_branch
      %47 = sbr.rel (0) target = $region53
    $region52: #{network_forward.1} parent=1 // pred_region
      _
    $region53: #{network_forward.1} parent=1 // pred_fallthru
      _
    // Predicated region
    $region54: #{network_forward.1} parent=1 // pred_check
      _
    $region55: #{network_forward.1} parent=1 // pred_check_branch
      %49 = sbr.rel (0) target = $region57
    $region56: #{network_forward.1} parent=1 // pred_region
      _
    $region57: #{network_forward.1} parent=1 // pred_fallthru
      _
    // Predicated region
    $region58: #{network_forward.1} parent=1 // pred_check
      _
    $region59: #{network_forward.1} parent=1 // pred_check_branch
      %51 = sbr.rel (0) target = $region61
    $region60: #{network_forward.1} parent=1 // pred_region
      _
    $region61: #{network_forward.1} parent=1 // pred_fallthru
      _
    // Predicated region
    $region62: #{network_forward.1} parent=1 // pred_check
      _
    $region63: #{network_forward.1} parent=1 // pred_check_branch
      %53 = sbr.rel (0) target = $region65
    $region64: #{network_forward.1} parent=1 // pred_region
      _
    $region65: #{network_forward.1} parent=1 // pred_fallthru
      _
    %v55 = vld [vmem:[%s1] sm:$0xff]
    %v56 = vld [vmem:[%s1 + $0x8] sm:$0xff]
    %v57 = vpack.c.bf16 %v56, %v55
    %v58 = vld [vmem:[%s2] sm:$0xf]
    %v59 = vld [vmem:[%s2 + $0x4] sm:$0xf]
    %v60 = vld [vmem:[%s2 + $0x8] sm:$0xf]
    %v61 = vld [vmem:[%s2 + $0xc] sm:$0xf]
    %v62 = vld [vmem:[%s3] sm:$0x1]
    %v64 = vlaneseq
    %v65 = vshrl.u32 %v64, 7
    %v66 = vsub.s32 0, %v65
    %v67 = vrot.slane %v62, %v66
    %v73 = vunpack.c.l.b16 %v58
    %v74 = vunpack.c.l.b16 %v59
    %v75 = vunpack.c.l.b16 %v60
    %v76 = vunpack.c.l.b16 %v61
    %v77 = vpack.c.b16 %v74, %v73
    %v78 = vpack.c.b16 %v76, %v75
    %vm81 = vcmask 261120
    %v83 = vsel %vm81, %v57, 0
    %85 = vmatprep.subr.bf16.mxu0 0
    %86 = vmatpush1.bf16.msra.mxu0 %v77
    %87 = vmatprep.subr.bf16.mxu0 0
    %88 = vmatpush1.bf16.msra.mxu0 %v78
    %89 = vmatprep.subr.bf16.mxu0 0
    %90 = vmatpush1.bf16.msra.mxu0 0
    %91 = vmatprep.subr.bf16.mxu0 0
    %92 = vmatpush1.bf16.msra.mxu0 0
    %93 = vmatprep.subr.bf16.mxu0 0
    %94 = vmatpush1.bf16.msra.mxu0 0
    %95 = vmatprep.subr.bf16.mxu0 0
    %96 = vmatpush1.bf16.msra.mxu0 0
    %97 = vmatprep.subr.bf16.mxu0 0
    %98 = vmatpush1.bf16.msra.mxu0 0
    %99 = vmatprep.subr.bf16.mxu0 0
    %100 = vmatpush1.bf16.msra.mxu0 0
    %101 = vmatprep.subr.bf16.mxu0 0
    %102 = vmatpush1.bf16.msra.mxu0 0
    %103 = vmatprep.subr.bf16.mxu0 0
    %104 = vmatpush1.bf16.msra.mxu0 0
    %105 = vmatprep.subr.bf16.mxu0 0
    %106 = vmatpush1.bf16.msra.mxu0 0
    %107 = vmatprep.subr.bf16.mxu0 0
    %108 = vmatpush1.bf16.msra.mxu0 0
    %109 = vmatprep.subr.bf16.mxu0 0
    %110 = vmatpush1.bf16.msra.mxu0 0
    %111 = vmatprep.subr.bf16.mxu0 0
    %112 = vmatpush1.bf16.msra.mxu0 0
    %113 = vmatprep.subr.bf16.mxu0 0
    %114 = vmatpush1.bf16.msra.mxu0 0
    %115 = vmatprep.subr.bf16.mxu0 0
    %116 = vmatpush1.bf16.msra.mxu0 0
    %117 = vmatprep.mubr.bf16.mxu0 0
    %118 = vmatmul.mubr.bf16.gmra.mrb[0].mxu0 %v83
    %v119 = vpop.f32.mrb[0].mxu0
    %v120 = vadd.f32 %v67, %v119
    %v121 = vpop.f32.mrb[0].mxu0
    %v122 = vpop.f32.mrb[0].mxu0
    %v123 = vadd.f32 %v67, %v122
    %v124 = vpop.f32.mrb[0].mxu0
    %125 = vdwg.mxu0
    %v126 = vpack.c.bf16 %v120, %v120
    %v127 = vpack.c.bf16 %v123, %v123
    %129 = vrot.lane.b32.xlu0 %v126, 96
    %v130 = vpop.permute.xlu0 %129
    %v132 = vsel %vm81, %v126, 0
    %v135 = vsel %vm81, %v130, 0
    %137 = vmatprep.subr.bf16.mxu0 0
    %138 = vmatpush1.bf16.xpose.msra.mxu0 %v135
    %139 = vmatprep.subr.bf16.mxu0 0
    %140 = vmatpush1.bf16.xpose.msra.mxu0 0
    %141 = vmatprep.subr.bf16.mxu0 0
    %142 = vmatpush1.bf16.xpose.msra.mxu0 0
    %143 = vmatprep.subr.bf16.mxu0 0
    %144 = vmatpush1.bf16.xpose.msra.mxu0 0
    %145 = vmatprep.subr.bf16.mxu0 0
    %146 = vmatpush1.bf16.xpose.msra.mxu0 0
    %147 = vmatprep.subr.bf16.mxu0 0
    %148 = vmatpush1.bf16.xpose.msra.mxu0 0
    %149 = vmatprep.subr.bf16.mxu0 0
    %150 = vmatpush1.bf16.xpose.msra.mxu0 0
    %151 = vmatprep.subr.bf16.mxu0 0
    %152 = vmatpush1.bf16.xpose.msra.mxu0 0
    %153 = vmatprep.subr.bf16.mxu0 0
    %154 = vmatpush1.bf16.xpose.msra.mxu0 0
    %155 = vmatprep.subr.bf16.mxu0 0
    %156 = vmatpush1.bf16.xpose.msra.mxu0 0
    %157 = vmatprep.subr.bf16.mxu0 0
    %158 = vmatpush1.bf16.xpose.msra.mxu0 0
    %159 = vmatprep.subr.bf16.mxu0 0
    %160 = vmatpush1.bf16.xpose.msra.mxu0 0
    %161 = vmatprep.subr.bf16.mxu0 0
    %162 = vmatpush1.bf16.xpose.msra.mxu0 0
    %163 = vmatprep.subr.bf16.mxu0 0
    %164 = vmatpush1.bf16.xpose.msra.mxu0 0
    %165 = vmatprep.subr.bf16.mxu0 0
    %166 = vmatpush1.bf16.xpose.msra.mxu0 0
    %167 = vmatprep.subr.bf16.mxu0 0
    %168 = vmatpush1.bf16.xpose.msra.mxu0 0
    %169 = vmatprep.mubr.bf16.mxu0 0
    %170 = vmatmul.mubr.bf16.gmra.mrb[0].mxu0 %v132
    %v171 = vpop.f32.mrb[0].mxu0
    %v172 = vadd.f32 0.0, %v171
    %v173 = vpop.f32.mrb[0].mxu0
    %v174 = vpop.f32.mrb[0].mxu0
    %v175 = vpop.f32.mrb[0].mxu0
    %176 = vdwg.mxu0
    %178 = vrot.lane.b32.xlu0 %v127, 96
    %v179 = vpop.permute.xlu0 %178
    %v181 = vsel %vm81, %v127, 0
    %v184 = vsel %vm81, %v179, 0
    %186 = vmatprep.subr.bf16.mxu0 0
    %187 = vmatpush1.bf16.xpose.msra.mxu0 %v184
    %188 = vmatprep.subr.bf16.mxu0 0
    %189 = vmatpush1.bf16.xpose.msra.mxu0 0
    %190 = vmatprep.subr.bf16.mxu0 0
    %191 = vmatpush1.bf16.xpose.msra.mxu0 0
    %192 = vmatprep.subr.bf16.mxu0 0
    %193 = vmatpush1.bf16.xpose.msra.mxu0 0
    %194 = vmatprep.subr.bf16.mxu0 0
    %195 = vmatpush1.bf16.xpose.msra.mxu0 0
    %196 = vmatprep.subr.bf16.mxu0 0
    %197 = vmatpush1.bf16.xpose.msra.mxu0 0
    %198 = vmatprep.subr.bf16.mxu0 0
    %199 = vmatpush1.bf16.xpose.msra.mxu0 0
    %200 = vmatprep.subr.bf16.mxu0 0
    %201 = vmatpush1.bf16.xpose.msra.mxu0 0
    %202 = vmatprep.subr.bf16.mxu0 0
    %203 = vmatpush1.bf16.xpose.msra.mxu0 0
    %204 = vmatprep.subr.bf16.mxu0 0
    %205 = vmatpush1.bf16.xpose.msra.mxu0 0
    %206 = vmatprep.subr.bf16.mxu0 0
    %207 = vmatpush1.bf16.xpose.msra.mxu0 0
    %208 = vmatprep.subr.bf16.mxu0 0
    %209 = vmatpush1.bf16.xpose.msra.mxu0 0
    %210 = vmatprep.subr.bf16.mxu0 0
    %211 = vmatpush1.bf16.xpose.msra.mxu0 0
    %212 = vmatprep.subr.bf16.mxu0 0
    %213 = vmatpush1.bf16.xpose.msra.mxu0 0
    %214 = vmatprep.subr.bf16.mxu0 0
    %215 = vmatpush1.bf16.xpose.msra.mxu0 0
    %216 = vmatprep.subr.bf16.mxu0 0
    %217 = vmatpush1.bf16.xpose.msra.mxu0 0
    %218 = vmatprep.mubr.bf16.mxu0 0
    %219 = vmatmul.mubr.bf16.gmra.mrb[0].mxu0 %v181
    %v220 = vpop.f32.mrb[0].mxu0
    %v221 = vadd.f32 0.0, %v220
    %v222 = vpop.f32.mrb[0].mxu0
    %v223 = vpop.f32.mrb[0].mxu0
    %v224 = vpop.f32.mrb[0].mxu0
    %225 = vdwg.mxu0
    %v226 = vlaneseq
    %v227 = vand.u32 %v226, 127
    %v228 = vld [vmem:[%s0] sm:$0x3]
    %v230 = vunpack.c.l.s4 1966171168
    %v231 = vunpack.c.0.s8 %v230
    %v232 = vlaneseq
    %v233 = vshrl.u32 %v232, 7
    %v234 = vsub.s32 %v231, %v233
    %v235 = vrot.slane %v228, %v234
    %v236 = vcombine.high %v235, %v235
    %v238 = vunpack.c.l.s4 1966171168
    %v239 = vunpack.c.0.s8 %v238
    %v240 = vlaneseq
    %v241 = vshrl.u32 %v240, 7
    %v242 = vsub.s32 %v239, %v241
    %v243 = vrot.slane %v235, %v242
    %v245 = vunpack.c.l.s4 1966171168
    %v246 = vunpack.c.0.s8 %v245
    %v247 = vlaneseq
    %v248 = vshrl.u32 %v247, 7
    %v249 = vsub.s32 %v246, %v248
    %v250 = vrot.slane %v236, %v249
    %v251 = vlaneseq
    %v252 = vshrl.u32 %v251, 7
    %v253 = vsub.s32 0, %v252
    %v254 = vrot.slane %v243, %v253
    %v255 = vlaneseq
    %v256 = vshrl.u32 %v255, 7
    %v257 = vsub.s32 0, %v256
    %v258 = vrot.slane %v250, %v257
    %259 = vset.pattern.permute.xlu0 0
    %260 = vperm.xlu0 %259, %v254
    %v261 = vpop.permute.xlu0 %260
    %262 = vset.pattern.permute.xlu0 0
    %263 = vperm.xlu0 %262, %v258
    %v264 = vpop.permute.xlu0 %263
    %vm265 = vcmp.lt.s32.totalorder %v227, %v261
    %vm266 = vcmp.lt.s32.totalorder %v227, %v264
    %v267 = vsel %vm265, %v172, -1e+30
    %v268 = vsel %vm266, %v221, -1e+30
    %vm269 = vcmask 64512
    %v270 = vsel %vm269, %v267, -inf
    %271 = vmax.xlane.f32.xlu0 %v270
    %v272 = vpop.xlane.xlu0 %271
    %v273 = vsel %vm269, %v268, -inf
    %274 = vmax.xlane.f32.xlu0 %v273
    %v275 = vpop.xlane.xlu0 %274
    %v276 = vsub.f32 %v267, %v272
    %v277 = vsub.f32 %v268, %v275
    %v278 = vmul.f32 %v276, 1.442695
    %v279 = vpow.pop %v278
    %v280 = vmul.f32 %v277, 1.442695
    %v281 = vpow.pop %v280
    %v282 = vsel %vm269, %v279, 0.0
    %283 = vadd.xlane.f32.xlu0 %v282
    %v284 = vpop.xlane.xlu0 %283
    %v285 = vsel %vm269, %v281, 0.0
    %286 = vadd.xlane.f32.xlu0 %v285
    %v287 = vpop.xlane.xlu0 %286
    %v288 = vrcp.pop %v284
    %v289 = vrcp.pop %v287
    %v290 = vmul.f32 %v279, %v288
    %v291 = vmul.f32 %v281, %v289
    %v292 = vpack.c.bf16 %v290, %v290
    %v293 = vpack.c.bf16 %v291, %v291
    %294 = vrot.lane.b32.xlu0 %v126, 64
    %v295 = vpop.permute.xlu0 %294
    %v297 = vsel %vm269, %v292, 0
    %vm299 = vcmask 1043456
    %v301 = vsel %vm299, %v295, 0
    %303 = vmatprep.subr.bf16.mxu0 0
    %304 = vmatpush1.bf16.msra.mxu0 %v301
    %305 = vmatprep.subr.bf16.mxu0 0
    %306 = vmatpush1.bf16.msra.mxu0 0
    %307 = vmatprep.subr.bf16.mxu0 0
    %308 = vmatpush1.bf16.msra.mxu0 0
    %309 = vmatprep.subr.bf16.mxu0 0
    %310 = vmatpush1.bf16.msra.mxu0 0
    %311 = vmatprep.subr.bf16.mxu0 0
    %312 = vmatpush1.bf16.msra.mxu0 0
    %313 = vmatprep.subr.bf16.mxu0 0
    %314 = vmatpush1.bf16.msra.mxu0 0
    %315 = vmatprep.subr.bf16.mxu0 0
    %316 = vmatpush1.bf16.msra.mxu0 0
    %317 = vmatprep.subr.bf16.mxu0 0
    %318 = vmatpush1.bf16.msra.mxu0 0
    %319 = vmatprep.subr.bf16.mxu0 0
    %320 = vmatpush1.bf16.msra.mxu0 0
    %321 = vmatprep.subr.bf16.mxu0 0
    %322 = vmatpush1.bf16.msra.mxu0 0
    %323 = vmatprep.subr.bf16.mxu0 0
    %324 = vmatpush1.bf16.msra.mxu0 0
    %325 = vmatprep.subr.bf16.mxu0 0
    %326 = vmatpush1.bf16.msra.mxu0 0
    %327 = vmatprep.subr.bf16.mxu0 0
    %328 = vmatpush1.bf16.msra.mxu0 0
    %329 = vmatprep.subr.bf16.mxu0 0
    %330 = vmatpush1.bf16.msra.mxu0 0
    %331 = vmatprep.subr.bf16.mxu0 0
    %332 = vmatpush1.bf16.msra.mxu0 0
    %333 = vmatprep.subr.bf16.mxu0 0
    %334 = vmatpush1.bf16.msra.mxu0 0
    %335 = vmatprep.mubr.bf16.mxu0 0
    %336 = vmatmul.mubr.bf16.gmra.mrb[0].mxu0 %v297
    %v337 = vpop.f32.mrb[0].mxu0
    %v338 = vadd.f32 0.0, %v337
    %v339 = vpop.f32.mrb[0].mxu0
    %v340 = vpop.f32.mrb[0].mxu0
    %v341 = vpop.f32.mrb[0].mxu0
    %342 = vdwg.mxu0
    %343 = vrot.lane.b32.xlu0 %v127, 64
    %v344 = vpop.permute.xlu0 %343
    %v346 = vsel %vm269, %v293, 0
    %v349 = vsel %vm299, %v344, 0
    %351 = vmatprep.subr.bf16.mxu0 0
    %352 = vmatpush1.bf16.msra.mxu0 %v349
    %353 = vmatprep.subr.bf16.mxu0 0
    %354 = vmatpush1.bf16.msra.mxu0 0
    %355 = vmatprep.subr.bf16.mxu0 0
    %356 = vmatpush1.bf16.msra.mxu0 0
    %357 = vmatprep.subr.bf16.mxu0 0
    %358 = vmatpush1.bf16.msra.mxu0 0
    %359 = vmatprep.subr.bf16.mxu0 0
    %360 = vmatpush1.bf16.msra.mxu0 0
    %361 = vmatprep.subr.bf16.mxu0 0
    %362 = vmatpush1.bf16.msra.mxu0 0
    %363 = vmatprep.subr.bf16.mxu0 0
    %364 = vmatpush1.bf16.msra.mxu0 0
    %365 = vmatprep.subr.bf16.mxu0 0
    %366 = vmatpush1.bf16.msra.mxu0 0
    %367 = vmatprep.subr.bf16.mxu0 0
    %368 = vmatpush1.bf16.msra.mxu0 0
    %369 = vmatprep.subr.bf16.mxu0 0
    %370 = vmatpush1.bf16.msra.mxu0 0
    %371 = vmatprep.subr.bf16.mxu0 0
    %372 = vmatpush1.bf16.msra.mxu0 0
    %373 = vmatprep.subr.bf16.mxu0 0
    %374 = vmatpush1.bf16.msra.mxu0 0
    %375 = vmatprep.subr.bf16.mxu0 0
    %376 = vmatpush1.bf16.msra.mxu0 0
    %377 = vmatprep.subr.bf16.mxu0 0
    %378 = vmatpush1.bf16.msra.mxu0 0
    %379 = vmatprep.subr.bf16.mxu0 0
    %380 = vmatpush1.bf16.msra.mxu0 0
    %381 = vmatprep.subr.bf16.mxu0 0
    %382 = vmatpush1.bf16.msra.mxu0 0
    %383 = vmatprep.mubr.bf16.mxu0 0
    %384 = vmatmul.mubr.bf16.gmra.mrb[0].mxu0 %v346
    %v385 = vpop.f32.mrb[0].mxu0
    %v386 = vadd.f32 0.0, %v385
    %v387 = vpop.f32.mrb[0].mxu0
    %v388 = vpop.f32.mrb[0].mxu0
    %v389 = vpop.f32.mrb[0].mxu0
    %390 = vdwg.mxu0
    %v391 = vpack.c.bf16 %v386, %v338
    %v392 = vld [vmem:[%s4] sm:$0xf]
    %v393 = vld [vmem:[%s4 + $0x4] sm:$0xf]
    %v394 = vld [vmem:[%s4 + $0x8] sm:$0xf]
    %v395 = vld [vmem:[%s4 + $0xc] sm:$0xf]
    %v396 = vld [vmem:[%s5] sm:$0x1]
    %v398 = vlaneseq
    %v399 = vshrl.u32 %v398, 7
    %v400 = vsub.s32 0, %v399
    %v401 = vrot.slane %v396, %v400
    %v407 = vunpack.c.l.b16 %v392
    %v408 = vunpack.c.l.b16 %v393
    %v409 = vunpack.c.l.b16 %v394
    %v410 = vunpack.c.l.b16 %v395
    %v411 = vpack.c.b16 %v408, %v407
    %v412 = vpack.c.b16 %v410, %v409
    %v416 = vsel %vm81, %v391, 0
    %418 = vmatprep.subr.bf16.mxu0 0
    %419 = vmatpush1.bf16.msra.mxu0 %v411
    %420 = vmatprep.subr.bf16.mxu0 0
    %421 = vmatpush1.bf16.msra.mxu0 %v412
    %422 = vmatprep.subr.bf16.mxu0 0
    %423 = vmatpush1.bf16.msra.mxu0 0
    %424 = vmatprep.subr.bf16.mxu0 0
    %425 = vmatpush1.bf16.msra.mxu0 0
    %426 = vmatprep.subr.bf16.mxu0 0
    %427 = vmatpush1.bf16.msra.mxu0 0
    %428 = vmatprep.subr.bf16.mxu0 0
    %429 = vmatpush1.bf16.msra.mxu0 0
    %430 = vmatprep.subr.bf16.mxu0 0
    %431 = vmatpush1.bf16.msra.mxu0 0
    %432 = vmatprep.subr.bf16.mxu0 0
    %433 = vmatpush1.bf16.msra.mxu0 0
    %434 = vmatprep.subr.bf16.mxu0 0
    %435 = vmatpush1.bf16.msra.mxu0 0
    %436 = vmatprep.subr.bf16.mxu0 0
    %437 = vmatpush1.bf16.msra.mxu0 0
    %438 = vmatprep.subr.bf16.mxu0 0
    %439 = vmatpush1.bf16.msra.mxu0 0
    %440 = vmatprep.subr.bf16.mxu0 0
    %441 = vmatpush1.bf16.msra.mxu0 0
    %442 = vmatprep.subr.bf16.mxu0 0
    %443 = vmatpush1.bf16.msra.mxu0 0
    %444 = vmatprep.subr.bf16.mxu0 0
    %445 = vmatpush1.bf16.msra.mxu0 0
    %446 = vmatprep.subr.bf16.mxu0 0
    %447 = vmatpush1.bf16.msra.mxu0 0
    %448 = vmatprep.subr.bf16.mxu0 0
    %449 = vmatpush1.bf16.msra.mxu0 0
    %450 = vmatprep.mubr.bf16.mxu0 0
    %451 = vmatmul.mubr.bf16.gmra.mrb[0].mxu0 %v416
    %v452 = vpop.f32.mrb[0].mxu0
    %v453 = vadd.f32 %v401, %v452
    %v454 = vpop.f32.mrb[0].mxu0
    %v455 = vpop.f32.mrb[0].mxu0
    %v456 = vadd.f32 %v401, %v455
    %v457 = vpop.f32.mrb[0].mxu0
    %458 = vdwg.mxu0
    %v459 = vadd.f32 %v55, %v453
    %v460 = vadd.f32 %v56, %v456
    %v461 = vsel %vm81, %v459, 0.0
    %462 = vadd.xlane.f32.xlu0 %v461
    %v463 = vpop.xlane.xlu0 %462
    %v464 = vsel %vm81, %v460, 0.0
    %465 = vadd.xlane.f32.xlu0 %v464
    %v466 = vpop.xlane.xlu0 %465
    %v467 = vrcp.pop 32.0
    %v468 = vmul.f32 %v463, %v467
    %v469 = vmul.f32 %v466, %v467
    %v470 = vsub.f32 %v459, %v468
    %v471 = vsub.f32 %v460, %v469
    %v472 = vmul.f32 %v470, %v470
    %v473 = vmul.f32 %v471, %v471
    %v474 = vsel %vm81, %v472, 0.0
    %475 = vadd.xlane.f32.xlu0 %v474
    %v476 = vpop.xlane.xlu0 %475
    %v477 = vsel %vm81, %v473, 0.0
    %478 = vadd.xlane.f32.xlu0 %v477
    %v479 = vpop.xlane.xlu0 %478
    %v480 = vmul.f32 %v476, %v467
    %v481 = vmul.f32 %v479, %v467
    %v482 = vadd.f32 %v480, 1e-05
    %v483 = vadd.f32 %v481, 1e-05
    %v484 = vrsqrt.pop %v482
    %v485 = vrsqrt.pop %v483
    %v486 = vmul.f32 %v470, %v484
    %v487 = vmul.f32 %v471, %v485
    %v488 = vld [vmem:[%s6] sm:$0x1]
    %v490 = vlaneseq
    %v491 = vshrl.u32 %v490, 7
    %v492 = vsub.s32 0, %v491
    %v493 = vrot.slane %v488, %v492
    %v495 = vmul.f32 %v486, %v493
    %v496 = vmul.f32 %v487, %v493
    %v497 = vld [vmem:[%s7] sm:$0x1]
    %v499 = vlaneseq
    %v500 = vshrl.u32 %v499, 7
    %v501 = vsub.s32 0, %v500
    %v502 = vrot.slane %v497, %v501
    %v504 = vadd.f32 %v495, %v502
    %v505 = vadd.f32 %v496, %v502
    %v506 = vpack.c.bf16 %v505, %v504
    %v507 = vld [vmem:[%s8] sm:$0xf]
    %v508 = vld [vmem:[%s8 + $0x4] sm:$0xf]
    %v509 = vld [vmem:[%s8 + $0x8] sm:$0xf]
    %v510 = vld [vmem:[%s8 + $0xc] sm:$0xf]
    %v511 = vld [vmem:[%s9] sm:$0x1]
    %v513 = vlaneseq
    %v514 = vshrl.u32 %v513, 7
    %v515 = vsub.s32 0, %v514
    %v516 = vrot.slane %v511, %v515
    %v522 = vunpack.c.l.b16 %v507
    %v523 = vunpack.c.l.b16 %v508
    %v524 = vunpack.c.l.b16 %v509
    %v525 = vunpack.c.l.b16 %v510
    %v526 = vpack.c.b16 %v523, %v522
    %v527 = vpack.c.b16 %v525, %v524
    %v531 = vsel %vm81, %v506, 0
    %533 = vmatprep.subr.bf16.mxu0 0
    %534 = vmatpush1.bf16.msra.mxu0 %v526
    %535 = vmatprep.subr.bf16.mxu0 0
    %536 = vmatpush1.bf16.msra.mxu0 %v527
    %537 = vmatprep.subr.bf16.mxu0 0
    %538 = vmatpush1.bf16.msra.mxu0 0
    %539 = vmatprep.subr.bf16.mxu0 0
    %540 = vmatpush1.bf16.msra.mxu0 0
    %541 = vmatprep.subr.bf16.mxu0 0
    %542 = vmatpush1.bf16.msra.mxu0 0
    %543 = vmatprep.subr.bf16.mxu0 0
    %544 = vmatpush1.bf16.msra.mxu0 0
    %545 = vmatprep.subr.bf16.mxu0 0
    %546 = vmatpush1.bf16.msra.mxu0 0
    %547 = vmatprep.subr.bf16.mxu0 0
    %548 = vmatpush1.bf16.msra.mxu0 0
    %549 = vmatprep.subr.bf16.mxu0 0
    %550 = vmatpush1.bf16.msra.mxu0 0
    %551 = vmatprep.subr.bf16.mxu0 0
    %552 = vmatpush1.bf16.msra.mxu0 0
    %553 = vmatprep.subr.bf16.mxu0 0
    %554 = vmatpush1.bf16.msra.mxu0 0
    %555 = vmatprep.subr.bf16.mxu0 0
    %556 = vmatpush1.bf16.msra.mxu0 0
    %557 = vmatprep.subr.bf16.mxu0 0
    %558 = vmatpush1.bf16.msra.mxu0 0
    %559 = vmatprep.subr.bf16.mxu0 0
    %560 = vmatpush1.bf16.msra.mxu0 0
    %561 = vmatprep.subr.bf16.mxu0 0
    %562 = vmatpush1.bf16.msra.mxu0 0
    %563 = vmatprep.subr.bf16.mxu0 0
    %564 = vmatpush1.bf16.msra.mxu0 0
    %565 = vmatprep.mubr.bf16.mxu0 0
    %566 = vmatmul.mubr.bf16.gmra.mrb[0].mxu0 %v531
    %v567 = vpop.f32.mrb[0].mxu0
    %v568 = vadd.f32 %v516, %v567
    %v569 = vpop.f32.mrb[0].mxu0
    %v570 = vpop.f32.mrb[0].mxu0
    %v571 = vadd.f32 %v516, %v570
    %v572 = vpop.f32.mrb[0].mxu0
    %573 = vdwg.mxu0
    %v574 = vmax.f32 %v568, 0.0
    %v575 = vmax.f32 %v571, 0.0
    %v576 = vpack.c.bf16 %v575, %v574
    %v577 = vld [vmem:[%s10] sm:$0xf]
    %v578 = vld [vmem:[%s10 + $0x4] sm:$0xf]
    %v579 = vld [vmem:[%s10 + $0x8] sm:$0xf]
    %v580 = vld [vmem:[%s10 + $0xc] sm:$0xf]
    %v581 = vld [vmem:[%s10 + $0x10] sm:$0xf]
    %v582 = vld [vmem:[%s10 + $0x14] sm:$0xf]
    %v583 = vld [vmem:[%s10 + $0x18] sm:$0xf]
    %v584 = vld [vmem:[%s10 + $0x1c] sm:$0xf]
    %v585 = vld [vmem:[%s11] sm:$0x1]
    %v587 = vlaneseq
    %v588 = vshrl.u32 %v587, 7
    %v589 = vsub.s32 0, %v588
    %v590 = vrot.slane %v585, %v589
    %v600 = vunpack.c.l.b16 %v577
    %v601 = vunpack.c.l.b16 %v578
    %v602 = vunpack.c.l.b16 %v579
    %v603 = vunpack.c.l.b16 %v580
    %v604 = vunpack.c.l.b16 %v581
    %v605 = vunpack.c.l.b16 %v582
    %v606 = vunpack.c.l.b16 %v583
    %v607 = vunpack.c.l.b16 %v584
    %v608 = vpack.c.b16 %v601, %v600
    %v609 = vpack.c.b16 %v603, %v602
    %v610 = vpack.c.b16 %v605, %v604
    %v611 = vpack.c.b16 %v607, %v606
    %vm616 = vcmask 523264
    %v618 = vsel %vm616, %v576, 0
    %620 = vmatprep.subr.bf16.mxu0 0
    %621 = vmatpush1.bf16.msra.mxu0 %v608
    %622 = vmatprep.subr.bf16.mxu0 0
    %623 = vmatpush1.bf16.msra.mxu0 %v609
    %624 = vmatprep.subr.bf16.mxu0 0
    %625 = vmatpush1.bf16.msra.mxu0 %v610
    %626 = vmatprep.subr.bf16.mxu0 0
    %627 = vmatpush1.bf16.msra.mxu0 %v611
    %628 = vmatprep.subr.bf16.mxu0 0
    %629 = vmatpush1.bf16.msra.mxu0 0
    %630 = vmatprep.subr.bf16.mxu0 0
    %631 = vmatpush1.bf16.msra.mxu0 0
    %632 = vmatprep.subr.bf16.mxu0 0
    %633 = vmatpush1.bf16.msra.mxu0 0
    %634 = vmatprep.subr.bf16.mxu0 0
    %635 = vmatpush1.bf16.msra.mxu0 0
    %636 = vmatprep.subr.bf16.mxu0 0
    %637 = vmatpush1.bf16.msra.mxu0 0
    %638 = vmatprep.subr.bf16.mxu0 0
    %639 = vmatpush1.bf16.msra.mxu0 0
    %640 = vmatprep.subr.bf16.mxu0 0
    %641 = vmatpush1.bf16.msra.mxu0 0
    %642 = vmatprep.subr.bf16.mxu0 0
    %643 = vmatpush1.bf16.msra.mxu0 0
    %644 = vmatprep.subr.bf16.mxu0 0
    %645 = vmatpush1.bf16.msra.mxu0 0
    %646 = vmatprep.subr.bf16.mxu0 0
    %647 = vmatpush1.bf16.msra.mxu0 0
    %648 = vmatprep.subr.bf16.mxu0 0
    %649 = vmatpush1.bf16.msra.mxu0 0
    %650 = vmatprep.subr.bf16.mxu0 0
    %651 = vmatpush1.bf16.msra.mxu0 0
    %652 = vmatprep.mubr.bf16.mxu0 0
    %653 = vmatmul.mubr.bf16.gmra.mrb[0].mxu0 %v618
    %v654 = vpop.f32.mrb[0].mxu0
    %v655 = vadd.f32 %v590, %v654
    %v656 = vpop.f32.mrb[0].mxu0
    %v657 = vpop.f32.mrb[0].mxu0
    %v658 = vadd.f32 %v590, %v657
    %v659 = vpop.f32.mrb[0].mxu0
    %660 = vdwg.mxu0
    %v661 = vadd.f32 %v504, %v655
    %v662 = vadd.f32 %v505, %v658
    %v663 = vsel %vm81, %v661, 0.0
    %664 = vadd.xlane.f32.xlu0 %v663
    %v665 = vpop.xlane.xlu0 %664
    %v666 = vsel %vm81, %v662, 0.0
    %667 = vadd.xlane.f32.xlu0 %v666
    %v668 = vpop.xlane.xlu0 %667
    %v669 = vmul.f32 %v665, %v467
    %v670 = vmul.f32 %v668, %v467
    %v671 = vsub.f32 %v661, %v669
    %v672 = vsub.f32 %v662, %v670
    %v673 = vmul.f32 %v671, %v671
    %v674 = vmul.f32 %v672, %v672
    %v675 = vsel %vm81, %v673, 0.0
    %676 = vadd.xlane.f32.xlu0 %v675
    %v677 = vpop.xlane.xlu0 %676
    %v678 = vsel %vm81, %v674, 0.0
    %679 = vadd.xlane.f32.xlu0 %v678
    %v680 = vpop.xlane.xlu0 %679
    %v681 = vmul.f32 %v677, %v467
    %v682 = vmul.f32 %v680, %v467
    %v683 = vadd.f32 %v681, 1e-05
    %v684 = vadd.f32 %v682, 1e-05
    %v685 = vrsqrt.pop %v683
    %v686 = vrsqrt.pop %v684
    %v687 = vmul.f32 %v671, %v685
    %v688 = vmul.f32 %v672, %v686
    %v689 = vld [vmem:[%s12] sm:$0x1]
    %v691 = vlaneseq
    %v692 = vshrl.u32 %v691, 7
    %v693 = vsub.s32 0, %v692
    %v694 = vrot.slane %v689, %v693
    %v696 = vmul.f32 %v687, %v694
    %v697 = vmul.f32 %v688, %v694
    %v698 = vld [vmem:[%s13] sm:$0x1]
    %v700 = vlaneseq
    %v701 = vshrl.u32 %v700, 7
    %v702 = vsub.s32 0, %v701
    %v703 = vrot.slane %v698, %v702
    %v705 = vadd.f32 %v696, %v703
    %v706 = vadd.f32 %v697, %v703
    %v707 = vpack.c.bf16 %v706, %v705
    %v708 = vld [vmem:[%s14] sm:$0xf]
    %v709 = vld [vmem:[%s14 + $0x4] sm:$0xf]
    %v710 = vld [vmem:[%s14 + $0x8] sm:$0xf]
    %v711 = vld [vmem:[%s14 + $0xc] sm:$0xf]
    %v712 = vld [vmem:[%s15] sm:$0x1]
    %v714 = vlaneseq
    %v715 = vshrl.u32 %v714, 7
    %v716 = vsub.s32 0, %v715
    %v717 = vrot.slane %v712, %v716
    %v723 = vunpack.c.l.b16 %v708
    %v724 = vunpack.c.l.b16 %v709
    %v725 = vunpack.c.l.b16 %v710
    %v726 = vunpack.c.l.b16 %v711
    %v727 = vpack.c.b16 %v724, %v723
    %v728 = vpack.c.b16 %v726, %v725
    %v732 = vsel %vm81, %v707, 0
    %734 = vmatprep.subr.bf16.mxu0 0
    %735 = vmatpush1.bf16.msra.mxu0 %v727
    %736 = vmatprep.subr.bf16.mxu0 0
    %737 = vmatpush1.bf16.msra.mxu0 %v728
    %738 = vmatprep.subr.bf16.mxu0 0
    %739 = vmatpush1.bf16.msra.mxu0 0
    %740 = vmatprep.subr.bf16.mxu0 0
    %741 = vmatpush1.bf16.msra.mxu0 0
    %742 = vmatprep.subr.bf16.mxu0 0
    %743 = vmatpush1.bf16.msra.mxu0 0
    %744 = vmatprep.subr.bf16.mxu0 0
    %745 = vmatpush1.bf16.msra.mxu0 0
    %746 = vmatprep.subr.bf16.mxu0 0
    %747 = vmatpush1.bf16.msra.mxu0 0
    %748 = vmatprep.subr.bf16.mxu0 0
    %749 = vmatpush1.bf16.msra.mxu0 0
    %750 = vmatprep.subr.bf16.mxu0 0
    %751 = vmatpush1.bf16.msra.mxu0 0
    %752 = vmatprep.subr.bf16.mxu0 0
    %753 = vmatpush1.bf16.msra.mxu0 0
    %754 = vmatprep.subr.bf16.mxu0 0
    %755 = vmatpush1.bf16.msra.mxu0 0
    %756 = vmatprep.subr.bf16.mxu0 0
    %757 = vmatpush1.bf16.msra.mxu0 0
    %758 = vmatprep.subr.bf16.mxu0 0
    %759 = vmatpush1.bf16.msra.mxu0 0
    %760 = vmatprep.subr.bf16.mxu0 0
    %761 = vmatpush1.bf16.msra.mxu0 0
    %762 = vmatprep.subr.bf16.mxu0 0
    %763 = vmatpush1.bf16.msra.mxu0 0
    %764 = vmatprep.subr.bf16.mxu0 0
    %765 = vmatpush1.bf16.msra.mxu0 0
    %766 = vmatprep.mubr.bf16.mxu0 0
    %767 = vmatmul.mubr.bf16.gmra.mrb[0].mxu0 %v732
    %v768 = vpop.f32.mrb[0].mxu0
    %v769 = vadd.f32 %v717, %v768
    %v770 = vpop.f32.mrb[0].mxu0
    %v771 = vpop.f32.mrb[0].mxu0
    %v772 = vadd.f32 %v717, %v771
    %v773 = vpop.f32.mrb[0].mxu0
    %774 = vdwg.mxu0
    %775 = vst [vmem:[#allocation2] sm:$0xff] %v769
    %776 = vst [vmem:[#allocation2 + $0x8] sm:$0xff] %v772
    // Predicated region
    $region66: #{network_forward.1} parent=1 // pred_check
      _
    $region67: #{network_forward.1} parent=1 // pred_check_branch
      %778 = sbr.rel (0) target = $region69
    $region68: #{network_forward.1} parent=1 // pred_region
      %s780 = ssub.s32 256, 256
      %781 = vsyncadd [#allocation3], %s780
      %s782 = sshll.u32 [#allocation2], 4
      %s783 = int_to_ptr.vmem [resolvable:$true] %s782
      %788 = dma.vmem_to_hbm [thread:$0]  %s783, 256, %s16, [#allocation3], 128, 128, 8
    $region69: #{network_forward.1} parent=1 // pred_fallthru
      _
    // Predicated region
    $region70: #{network_forward.1} parent=1 // pred_check
      _
    $region71: #{network_forward.1} parent=1 // pred_check_branch
      %790 = sbr.rel (0) target = $region73
    $region72: #{network_forward.1} parent=1 // pred_region
      %791 = dma.done [#allocation3], 256
    $region73: #{network_forward.1} parent=1 // pred_fallthru
      _
    %792 = vsyncpa [#allocation3], 1

</llo_original>
